<compile_context>
chip_gen: v7x
topology: tpu7x:2x2x1
jax: 0.10.0
libtpu: 0.0.40
codegen_flags: <defaults>
</compile_context>

<pallas_src>
import functools
import math

import jax
import jax.numpy as jnp
from jax import lax
from jax.experimental import pallas as pl
from jax.experimental.pallas import tpu as pltpu


_LANE = 128
_DEFAULT_LANE_CAP = 4096          # upper bound on the streaming lane tile


def _vmem_caps():
    """(vmem_limit_bytes, kernel_buffer_budget_bytes), generation aware.

    v5e/v6e have 128 MiB VMEM per core -> raise the limit so mid-size problems stay on the
    2x-traffic fused path.  v7x has only 64 MiB per TensorCore -> cap well below that.
    Falls back to v7x-safe numbers if the query is unavailable.
    """
    cap = None
    try:
        info = pltpu.get_tpu_info()
        cap = getattr(info, "vmem_capacity_bytes", None)
    except Exception:
        cap = None
    if cap is None:
        cap = 64 * 1024 * 1024
    if cap >= 96 * 1024 * 1024:               # v5e / v6e (128 MiB physical)
        return 100 * 1024 * 1024, 80 * 1024 * 1024
    return 44 * 1024 * 1024, 36 * 1024 * 1024  # v7x (64 MiB per TC)


def _compiler_params(dimension_semantics, vmem_limit):
    return pltpu.CompilerParams(
        dimension_semantics=dimension_semantics,
        vmem_limit_bytes=vmem_limit,
    )


def _block_spec(block_shape, index_map, buffers=None):
    """BlockSpec with optional deeper input pipelining (falls back if unsupported)."""
    if buffers is None:
        return pl.BlockSpec(block_shape, index_map)
    try:
        return pl.BlockSpec(block_shape, index_map, pipeline_mode=pl.Buffered(buffers))
    except (TypeError, AttributeError):
        return pl.BlockSpec(block_shape, index_map)


def _band_attn_from_gap(w_ref, gap, *, k, pad, bands):
    """sigmoid(Conv1d_k(gap)) for a (bands, 1) f32 column. Zero padding, no bias.

    The conv is expressed as a (bands, bands) band matrix times the gap column: one tiny
    MXU matmul, correct for any band count (no sublane roll, so non-multiple-of-8 band
    counts like 138 are safe).  O(bands^2 * k) elements ~ a few vregs: free filler.
    """
    row = lax.broadcasted_iota(jnp.int32, (bands, bands), 0)   # output band d
    col = lax.broadcasted_iota(jnp.int32, (bands, bands), 1)   # input band s
    wmat = jnp.zeros((bands, bands), jnp.float32)
    for j in range(k):
        off = j - pad                                          # y[d] += w[j] * gap[d + off]
        wj = w_ref[0, j]
        wmat = wmat + jnp.where(col - row == off, wj, 0.0)     # OOB taps simply absent
    pre = jnp.dot(wmat, gap, preferred_element_type=jnp.float32)   # (bands, 1)
    return 1.0 / (1.0 + jnp.exp(-pre))


# ---------------------------------------------------------------------------
# Path A: fused single pass (whole (bands, HW) slab per batch element)
# ---------------------------------------------------------------------------
def _fused_kernel(w_ref, x_ref, o_ref, *, k, pad, bands, inv_hw):
    # w_ref: SMEM (1, k); x_ref / o_ref: VMEM (1, bands, HW)
    xf = x_ref[0].astype(jnp.float32)                          # (bands, HW), f32 arithmetic
    gap = jnp.sum(xf, axis=1, keepdims=True) * inv_hw
    attn = _band_attn_from_gap(w_ref, gap, k=k, pad=pad, bands=bands)
    o_ref[0] = (xf * attn).astype(o_ref.dtype)


# ---------------------------------------------------------------------------
# Path B, pass 1: lane-tiled GAP reduction -> attn (B, bands, 1)
# ---------------------------------------------------------------------------
def _gap_attn_kernel(w_ref, x_ref, attn_ref, acc_ref, *, k, pad, bands, inv_hw,
                     hw, tile, need_mask):
    i = pl.program_id(1)

    @pl.when(i == 0)
    def _init():
        acc_ref[...] = jnp.zeros_like(acc_ref)

    xf = x_ref[0].astype(jnp.float32)                          # (bands, tile)
    if need_mask:
        # Tail tile: lanes past HW hold undefined data from the partial input block.
        lane = lax.broadcasted_iota(jnp.int32, (bands, tile), 1)
        xf = jnp.where(i * tile + lane < hw, xf, 0.0)

    # Per-lane partial sums (pure VPU adds over 128-aligned value slices); the single
    # cross-lane (XLU) reduce happens once per batch element in the finalize.
    part = jnp.zeros((bands, _LANE), jnp.float32)
    for c in range(tile // _LANE):
        part = part + xf[:, c * _LANE:(c + 1) * _LANE]
    acc_ref[...] += part

    @pl.when(i == pl.num_programs(1) - 1)
    def _finalize():
        gap = jnp.sum(acc_ref[...], axis=1, keepdims=True) * inv_hw
        attn_ref[0] = _band_attn_from_gap(w_ref, gap, k=k, pad=pad, bands=bands)


# ---------------------------------------------------------------------------
# Path B, pass 2: lane-dense broadcast multiply (partial tail store is masked by Pallas)
# ---------------------------------------------------------------------------
def _scale_kernel(attn_ref, x_ref, o_ref):
    attn = attn_ref[0].astype(o_ref.dtype)                     # (bands, 1)
    o_ref[0] = x_ref[0].astype(o_ref.dtype) * attn             # native bf16 on v6e/v7x


# ---------------------------------------------------------------------------
# Wrapper
# ---------------------------------------------------------------------------
def eca_spectral_attention_3d(x, weight, *, lane_tile_cap=None, force_tiled=False):
    """ECA_SpectralAttention_3d.forward.  x: (B, 1, bands, H, W); weight: (1, 1, k)."""
    B, C, bands, H, W = x.shape
    assert C == 1, "ECA_SpectralAttention_3d.forward requires channel dim == 1"
    k = weight.shape[-1]
    pad = (k - 1) // 2
    HW = H * W
    inv_hw = 1.0 / HW

    x2 = x.reshape(B, bands, HW)
    w2 = weight.reshape(1, k).astype(jnp.float32)

    vmem_limit, vmem_budget = _vmem_caps()
    itemsize = jnp.dtype(x.dtype).itemsize

    # dtype-aware fused estimate: double-buffered x + out blocks plus ~2 f32 temporaries
    fused_bytes = bands * HW * (2 * itemsize + 2 * itemsize + 2 * 4)

    if not force_tiled and fused_bytes <= vmem_budget:
        # ---- fused single pass: grid=(B,), one batch element per step ----
        kernel = functools.partial(_fused_kernel, k=k, pad=pad, bands=bands, inv_hw=inv_hw)
        out = pl.pallas_call(
            kernel,
            out_shape=jax.ShapeDtypeStruct((B, bands, HW), x.dtype),
            grid_spec=pltpu.PrefetchScalarGridSpec(
                num_scalar_prefetch=0,
                grid=(B,),
                in_specs=[
                    pl.BlockSpec(memory_space=pltpu.MemorySpace.SMEM),     # conv taps
                    pl.BlockSpec((1, bands, HW), lambda b: (b, 0, 0)),     # x slab
                ],
                out_specs=pl.BlockSpec((1, bands, HW), lambda b: (b, 0, 0)),
            ),
            compiler_params=_compiler_params(("parallel",), vmem_limit),
        )(w2, x2)
        return out.reshape(B, 1, bands, H, W)

    # ---- two-pass tiled path: lane tile grows to the VMEM budget (128-aligned) ----
    cap = _DEFAULT_LANE_CAP if lane_tile_cap is None else max(_LANE, (lane_tile_cap // _LANE) * _LANE)
    # Per lane of tile: 3 input buffers + 2 output buffers + ~2 f32 temporaries.
    per_lane_bytes = bands * (3 * itemsize + 2 * itemsize + 2 * 4)
    t = (vmem_budget // per_lane_bytes) // _LANE * _LANE
    hw_ceil = pl.cdiv(HW, _LANE) * _LANE
    t = max(_LANE, min(t, cap, hw_ceil))
    num_t = pl.cdiv(HW, t)
    need_mask = (HW % t) != 0          # tail tile must be masked in the reduction pass

    gap_kernel = functools.partial(
        _gap_attn_kernel, k=k, pad=pad, bands=bands, inv_hw=inv_hw,
        hw=HW, tile=t, need_mask=need_mask)
    attn = pl.pallas_call(
        gap_kernel,
        out_shape=jax.ShapeDtypeStruct((B, bands, 1), jnp.float32),
        grid_spec=pltpu.PrefetchScalarGridSpec(
            num_scalar_prefetch=0,
            grid=(B, num_t),
            in_specs=[
                pl.BlockSpec(memory_space=pltpu.MemorySpace.SMEM),              # conv taps
                _block_spec((1, bands, t), lambda b, i: (b, 0, i), buffers=3),  # x stream
            ],
            out_specs=pl.BlockSpec((1, bands, 1), lambda b, i: (b, 0, 0)),      # resident attn
            scratch_shapes=[pltpu.VMEM((bands, _LANE), jnp.float32)],           # per-lane acc
        ),
        compiler_params=_compiler_params(("parallel", "arbitrary"), vmem_limit),
    )(w2, x2)

    out = pl.pallas_call(
        _scale_kernel,
        out_shape=jax.ShapeDtypeStruct((B, bands, HW), x.dtype),
        grid_spec=pltpu.PrefetchScalarGridSpec(
            num_scalar_prefetch=0,
            grid=(B, num_t),
            in_specs=[
                pl.BlockSpec((1, bands, 1), lambda b, i: (b, 0, 0)),            # attn
                _block_spec((1, bands, t), lambda b, i: (b, 0, i), buffers=3),  # x stream
            ],
            out_specs=pl.BlockSpec((1, bands, t), lambda b, i: (b, 0, i)),
        ),
        compiler_params=_compiler_params(("parallel", "parallel"), vmem_limit),
    )(attn, x2)

    return out.reshape(B, 1, bands, H, W)


# ---------------------------------------------------------------------------
# Pure-JAX reference mirroring the PyTorch forward (f32 math)
# ---------------------------------------------------------------------------
def _reference(x, weight):
    B, C, bands, H, W = x.shape
    k = weight.shape[-1]
    pad = (k - 1) // 2
    w = weight.reshape(k)
    xf = x.astype(jnp.float32)
    gap = jnp.mean(xf, axis=(3, 4)).reshape(B, bands)             # (B, bands)
    gp = jnp.pad(gap, ((0, 0), (pad, pad)))
    y = sum(w[j] * gp[:, j:j + bands] for j in range(k))          # (B, bands)
    attn = jax.nn.sigmoid(y)
    return xf * attn[:, None, :, None, None]


if __name__ == "__main__":
    key = jax.random.PRNGKey(0)

    def make_inputs(rng, B, bands, H, W, dtype=jnp.float32):
        gamma, b = 2, 1
        kernel_size = int(abs((math.log(bands, 2) + b) / gamma))  # as in __init__
        if kernel_size % 2 == 0:
            kernel_size += 1
        kx, kw = jax.random.split(rng)
        x = jax.random.normal(kx, (B, 1, bands, H, W), dtype=jnp.float32).astype(dtype)
        bound = 1.0 / math.sqrt(kernel_size)                      # PyTorch Conv1d init bound
        w = jax.random.uniform(kw, (1, 1, kernel_size), jnp.float32, -bound, bound)
        return x, w

    keys = jax.random.split(key, 3)

    # 1) small problem -> fused single-pass path (f32)
    x, w = make_inputs(keys[0], B=2, bands=16, H=16, W=16)
    out = jax.block_until_ready(eca_spectral_attention_3d(x, w))
    ref = _reference(x, w)
    assert out.shape == x.shape
    assert jnp.allclose(out, ref, atol=1e-5, rtol=1e-5), "fused path mismatch vs reference"

    # 2) tiled two-pass path: non-128-aligned HW (masked tail), non-multiple-of-8 bands,
    #    tiny lane-tile cap forced to exercise multiple tiles per batch element.
    x2, w2 = make_inputs(keys[1], B=2, bands=30, H=17, W=17)
    out2 = jax.block_until_ready(
        eca_spectral_attention_3d(x2, w2, force_tiled=True, lane_tile_cap=128))
    ref2 = _reference(x2, w2)
    assert out2.shape == x2.shape
    assert jnp.allclose(out2, ref2, atol=1e-5, rtol=1e-5), "tiled path mismatch vs reference"

    # 3) the encoder's actual in_shape (bands=138, 17x17), bf16 I/O, fused path ...
    x3, w3 = make_inputs(keys[2], B=2, bands=138, H=17, W=17, dtype=jnp.bfloat16)
    out3 = jax.block_until_ready(eca_spectral_attention_3d(x3, w3))
    ref3 = _reference(x3, w3)
    assert out3.dtype == jnp.bfloat16
    assert jnp.allclose(out3.astype(jnp.float32), ref3, atol=3e-2, rtol=3e-2), "bf16 fused mismatch"

    # ... and the same shape forced through the tiled path (bf16 streaming multiply + masked tail)
    out4 = jax.block_until_ready(eca_spectral_attention_3d(x3, w3, force_tiled=True))
    assert jnp.allclose(out4.astype(jnp.float32), ref3, atol=3e-2, rtol=3e-2), "bf16 tiled mismatch"

    print("KERNEL_OK")
</pallas_src>

<mosaic_0001>
module attributes {stable_mosaic.version = 11 : i64} {
  func.func @_fused_kernel(%arg0: i32, %arg1: memref<1x3xf32, #tpu.memory_space<smem>>, %arg2: memref<1x16x256xf32, #tpu.memory_space<vmem>>, %arg3: memref<1x16x256xf32, #tpu.memory_space<vmem>>) attributes {dimension_semantics = [#tpu.dimension_semantics<parallel>], iteration_bounds = array<i64: 2>, scalar_prefetch = 0 : i64, scratch_operands = 0 : i64, tpu.core_type = #tpu.core_type<tc>, window_params = [{transform_indices = @transform_0, window_bounds = array<i64: 1, 3>}, {transform_indices = @transform_1, window_bounds = array<i64: 1, 16, 256>}, {transform_indices = @transform_2, window_bounds = array<i64: 1, 16, 256>}]} {
    %c0 = arith.constant 0 : index
    %c0_0 = arith.constant 0 : index
    %c0_1 = arith.constant 0 : index
    %0 = vector.load %arg2[%c0, %c0_0, %c0_1] : memref<1x16x256xf32, #tpu.memory_space<vmem>>, vector<1x16x256xf32>
    %1 = vector.shape_cast %0 : vector<1x16x256xf32> to vector<16x256xf32>
    %cst = arith.constant dense<0.000000e+00> : vector<16xf32>
    %2 = vector.multi_reduction <add>, %1, %cst [1] : vector<16x256xf32> to vector<16xf32>
    %3 = vector.shape_cast %2 : vector<16xf32> to vector<16x1xf32>
    %cst_2 = arith.constant 3.906250e-03 : f32
    %4 = vector.broadcast %cst_2 : f32 to vector<16x1xf32>
    %5 = arith.mulf %3, %4 : vector<16x1xf32>
    %6 = tpu.iota {dimensions = array<i32: 0>} : vector<16x16xi32>
    %7 = tpu.iota {dimensions = array<i32: 1>} : vector<16x16xi32>
    %cst_3 = arith.constant 0.000000e+00 : f32
    %8 = vector.broadcast %cst_3 : f32 to vector<16x16xf32>
    %c0_4 = arith.constant 0 : index
    %c0_5 = arith.constant 0 : index
    %9 = memref.load %arg1[%c0_4, %c0_5] : memref<1x3xf32, #tpu.memory_space<smem>>
    %10 = arith.subi %7, %6 : vector<16x16xi32>
    %c-1_i32 = arith.constant -1 : i32
    %11 = vector.broadcast %c-1_i32 : i32 to vector<16x16xi32>
    %12 = arith.cmpi eq, %10, %11 : vector<16x16xi32>
    %cst_6 = arith.constant 0.000000e+00 : f32
    %13 = vector.broadcast %9 : f32 to vector<16x16xf32>
    %14 = vector.broadcast %cst_6 : f32 to vector<16x16xf32>
    %15 = arith.select %12, %13, %14 : vector<16x16xi1>, vector<16x16xf32>
    %16 = arith.addf %8, %15 : vector<16x16xf32>
    %c0_7 = arith.constant 0 : index
    %c1 = arith.constant 1 : index
    %17 = memref.load %arg1[%c0_7, %c1] : memref<1x3xf32, #tpu.memory_space<smem>>
    %18 = arith.subi %7, %6 : vector<16x16xi32>
    %c0_i32 = arith.constant 0 : i32
    %19 = vector.broadcast %c0_i32 : i32 to vector<16x16xi32>
    %20 = arith.cmpi eq, %18, %19 : vector<16x16xi32>
    %cst_8 = arith.constant 0.000000e+00 : f32
    %21 = vector.broadcast %17 : f32 to vector<16x16xf32>
    %22 = vector.broadcast %cst_8 : f32 to vector<16x16xf32>
    %23 = arith.select %20, %21, %22 : vector<16x16xi1>, vector<16x16xf32>
    %24 = arith.addf %16, %23 : vector<16x16xf32>
    %c0_9 = arith.constant 0 : index
    %c2 = arith.constant 2 : index
    %25 = memref.load %arg1[%c0_9, %c2] : memref<1x3xf32, #tpu.memory_space<smem>>
    %26 = arith.subi %7, %6 : vector<16x16xi32>
    %c1_i32 = arith.constant 1 : i32
    %27 = vector.broadcast %c1_i32 : i32 to vector<16x16xi32>
    %28 = arith.cmpi eq, %26, %27 : vector<16x16xi32>
    %cst_10 = arith.constant 0.000000e+00 : f32
    %29 = vector.broadcast %25 : f32 to vector<16x16xf32>
    %30 = vector.broadcast %cst_10 : f32 to vector<16x16xf32>
    %31 = arith.select %28, %29, %30 : vector<16x16xi1>, vector<16x16xf32>
    %32 = arith.addf %24, %31 : vector<16x16xf32>
    %cst_11 = arith.constant dense<0.000000e+00> : vector<16x1xf32>
    %33 = tpu.matmul %32, %5, %cst_11 {dimension_numbers = #tpu.dot_dimension_numbers<[1], [0], [0], [1], [0, 0, 1, 1], [], []>} : vector<16x16xf32>, vector<16x1xf32>, vector<16x1xf32> -> vector<16x1xf32>
    %cst_12 = arith.constant 0.000000e+00 : f32
    %34 = vector.broadcast %cst_12 : f32 to vector<16x1xf32>
    %35 = arith.subf %34, %33 : vector<16x1xf32>
    %36 = math.exp %35 : vector<16x1xf32>
    %cst_13 = arith.constant 1.000000e+00 : f32
    %37 = vector.broadcast %cst_13 : f32 to vector<16x1xf32>
    %38 = arith.addf %37, %36 : vector<16x1xf32>
    %cst_14 = arith.constant 1.000000e+00 : f32
    %39 = vector.broadcast %cst_14 : f32 to vector<16x1xf32>
    %40 = arith.divf %39, %38 : vector<16x1xf32>
    %41 = vector.broadcast %40 : vector<16x1xf32> to vector<16x256xf32>
    %42 = arith.mulf %1, %41 : vector<16x256xf32>
    %c0_15 = arith.constant 0 : index
    %c0_16 = arith.constant 0 : index
    %c0_17 = arith.constant 0 : index
    %43 = vector.load %arg3[%c0_15, %c0_16, %c0_17] : memref<1x16x256xf32, #tpu.memory_space<vmem>>, vector<1x16x256xf32>
    %44 = vector.shape_cast %43 : vector<1x16x256xf32> to vector<16x256xf32>
    %45 = vector.shape_cast %42 : vector<16x256xf32> to vector<1x16x256xf32>
    tpu.vector_store %arg3[%c0_15, %c0_16, %c0_17], %45 {strides = array<i32>} : memref<1x16x256xf32, #tpu.memory_space<vmem>>, vector<1x16x256xf32>,
    return
  }
  func.func @transform_0(%arg0: i32) -> (i32, i32) {
    %c0_i32 = arith.constant 0 : i32
    %c0_i32_0 = arith.constant 0 : i32
    %c0_i32_1 = arith.constant 0 : i32
    return %c0_i32, %c0_i32_0 : i32, i32
  }
  func.func @transform_1(%arg0: i32) -> (i32, i32, i32) {
    %c0_i32 = arith.constant 0 : i32
    %c0_i32_0 = arith.constant 0 : i32
    %c0_i32_1 = arith.constant 0 : i32
    return %arg0, %c0_i32, %c0_i32_0 : i32, i32, i32
  }
  func.func @transform_2(%arg0: i32) -> (i32, i32, i32) {
    %c0_i32 = arith.constant 0 : i32
    %c0_i32_0 = arith.constant 0 : i32
    %c0_i32_1 = arith.constant 0 : i32
    return %arg0, %c0_i32, %c0_i32_0 : i32, i32, i32
  }
}

</mosaic_0001>

<llo_original>
// kernel: tpu_custom_call.1
$region0: #{tpu_custom_call.1}
  #allocation0 [shape = 'u32[]', space=smem, size = 0x4, offset = 0x4, fixed_abs, tag = 'smem constant byte address 0x4 - core index']
  #allocation1 [shape = 'u32[144,128]{1,0:T(1,128)}', space=vmem, size = 0x12000, scoped, tag = 'internal scratch']
  %s0 = inlined_call_operand.hbm [shape: f32[1,3], index: 0, kind: input, shape index: {}]
  %s1 = inlined_call_operand.hbm [shape: f32[2,16,256], index: 1, kind: input, shape index: {}]
  %s2 = inlined_call_operand.hbm [shape: f32[2,16,256], index: 2, kind: output, shape index: {}]
  %s3 = sld [smem:[#allocation0]]
  $region49: #{tpu_custom_call.1} parent=0
    _
  %s5 = ssub.s32 1, %s3
  %s6 = scalar_select 0, %s5, %s3
  $region1: #{tpu_custom_call.1} parent=0
    #allocation2 [shape = 'u8[512]{0}', space=smem, size = 0x200, scoped, tag = 'input window, operand 0, single buffered']
    #allocation3 [shape = 's32[2]{0}', space=sflag, size = 0x8, scoped, tag = 'scoped memory for tpu_custom_call.1']
    #allocation4 [shape = 's32[2]{0}', space=sflag, size = 0x8, scoped, tag = 'scoped memory for tpu_custom_call.1']
    #allocation5 [shape = 's32[2]{0}', space=sflag, size = 0x8, scoped, tag = 'scoped memory for tpu_custom_call.1']
    #allocation6 [shape = 'u8[32768]{0}', space=vmem, size = 0x8000, scoped, tag = 'input window, operand 1']
    #allocation7 [shape = 'u8[32768]{0}', space=vmem, size = 0x8000, scoped, tag = 'output window, operand 0']
    %7 = vsyncpa [#allocation5], 0
    %8 = vsyncpa [#allocation3], 0
    %s9 = scalar_lea.sflag [#allocation3], 1
    %10 = vsyncpa %s9, 0
    %11 = vsyncpa [#allocation4], 0
    %s12 = scalar_lea.sflag [#allocation4], 1
    %13 = vsyncpa %s12, 0
    loop: start=0, step=1, limit=4
    $region2: #{tpu_custom_call.1} parent=1 // loop_pre_header
      _
    $region3: #{tpu_custom_call.1} parent=1 // loop_header
      %s15 = sphi 0, %s19
      %p16 = scmp.ge.s32.totalorder %s15, 4
      %s23 = sphi 0, %s23
      %s25 = sphi 0, %s23
      %s26 = sphi 0, %s25
      %s40 = sphi 0, %s26
      %s46 = sphi 0, %s48
      %s49 = sphi 0, %s46
      %s50 = sphi 0, %s49
      %s66 = sphi 0, %s50
      %s72 = sphi 0, %s74
      %s75 = sphi 0, %s72
      %s76 = sphi 0, %s75
      %s92 = sphi 0, %s76
    $region4: #{tpu_custom_call.1} parent=1 // loop_header_branch
      %18 = sbr.rel (%p16) target = $region8
    $region5: #{tpu_custom_call.1} parent=1 // loop_body
      %s20 = ssub.s32 %s15, 1
      %s21 = ssub.s32 %s15, 2
      %s22 = sadd.s32 %s15, 1
      %s24 = sadd.s32 %s23, 1
      %p27 = scmp.eq.s32.totalorder %s15, 1
      %p28 = scmp.ne.s32.totalorder %s23, %s25
      %p29 = scmp.eq.s32.totalorder %s15, 0
      %p30 = por %p28, %p29
      %p31 = scmp.ne.s32.totalorder %s23, %s25
      %p32 = scmp.eq.s32.totalorder %s20, 1
      %p33 = por %p31, %p32
      %p34 = scmp.ne.s32.totalorder %s25, %s26
      %p35 = scmp.eq.s32.totalorder %s20, 0
      %p36 = por %p34, %p35
      %p37 = scmp.ne.s32.totalorder %s25, %s26
      %p38 = scmp.eq.s32.totalorder %s21, 1
      %p39 = por %p37, %p38
      %p41 = scmp.ne.s32.totalorder %s26, %s40
      %p42 = scmp.eq.s32.totalorder %s21, 0
      %p43 = por %p41, %p42
      %s44 = ssub.s32 %s15, %s22
      %p45 = scmp.eq.s32.totalorder %s44, 0
      %s47 = sadd.s32 %s46, 1
      %s48 = scalar_select %p45, %s46, %s47
      %p51 = pneg %p45
      %p52 = scmp.eq.s32.totalorder %s15, 1
      %p53 = por %p51, %p52
      %p54 = scmp.ne.s32.totalorder %s46, %s49
      %p55 = scmp.eq.s32.totalorder %s15, 0
      %p56 = por %p54, %p55
      %p57 = scmp.ne.s32.totalorder %s46, %s49
      %p58 = scmp.eq.s32.totalorder %s20, 1
      %p59 = por %p57, %p58
      %p60 = scmp.ne.s32.totalorder %s49, %s50
      %p61 = scmp.eq.s32.totalorder %s20, 0
      %p62 = por %p60, %p61
      %p63 = scmp.ne.s32.totalorder %s49, %s50
      %p64 = scmp.eq.s32.totalorder %s21, 1
      %p65 = por %p63, %p64
      %p67 = scmp.ne.s32.totalorder %s50, %s66
      %p68 = scmp.eq.s32.totalorder %s21, 0
      %p69 = por %p67, %p68
      %s70 = ssub.s32 %s15, %s22
      %p71 = scmp.eq.s32.totalorder %s70, 0
      %s73 = sadd.s32 %s72, 1
      %s74 = scalar_select %p71, %s72, %s73
      %p77 = pneg %p71
      %p78 = scmp.eq.s32.totalorder %s15, 1
      %p79 = por %p77, %p78
      %p80 = scmp.ne.s32.totalorder %s72, %s75
      %p81 = scmp.eq.s32.totalorder %s15, 0
      %p82 = por %p80, %p81
      %p83 = scmp.ne.s32.totalorder %s72, %s75
      %p84 = scmp.eq.s32.totalorder %s20, 1
      %p85 = por %p83, %p84
      %p86 = scmp.ne.s32.totalorder %s75, %s76
      %p87 = scmp.eq.s32.totalorder %s20, 0
      %p88 = por %p86, %p87
      %p89 = scmp.ne.s32.totalorder %s75, %s76
      %p90 = scmp.eq.s32.totalorder %s21, 1
      %p91 = por %p89, %p90
      %p93 = scmp.ne.s32.totalorder %s76, %s92
      %p94 = scmp.eq.s32.totalorder %s21, 0
      %p95 = por %p93, %p94
      %p96 = scmp.le.s32.totalorder 1, %s15
      %p97 = scmp.lt.s32.totalorder %s15, 3
      %p98 = pnand %p96, %p97
      %p99 = pneg %p98
      // Predicated region
      $region9: #{tpu_custom_call.1} parent=5 // pred_check
        _
      $region10: #{tpu_custom_call.1} parent=5 // pred_check_branch
        %101 = sbr.rel (%p98) target = $region12
      $region11: #{tpu_custom_call.1} parent=5 // pred_region
        %s102 = ssub.s32 %s15, 1
        // Predicated region
        $region13: #{tpu_custom_call.1} parent=11 // pred_check
          %p103 = pneg %p36
        $region14: #{tpu_custom_call.1} parent=11 // pred_check_branch
          %105 = sbr.rel (%p103) target = $region16
        $region15: #{tpu_custom_call.1} parent=11 // pred_region
          %s107 = ssub.s32 16, 16
          %108 = vsyncadd [#allocation5], %s107
          %111 = dma.hbm_to_smem %s0, 16, [#allocation2], [#allocation5]
        $region16: #{tpu_custom_call.1} parent=11 // pred_fallthru
          _
      $region12: #{tpu_custom_call.1} parent=5 // pred_fallthru
        _
      %p112 = scmp.lt.s32.totalorder %s15, 2
      // Predicated region
      $region17: #{tpu_custom_call.1} parent=5 // pred_check
        %p113 = pneg %p112
      $region18: #{tpu_custom_call.1} parent=5 // pred_check_branch
        %115 = sbr.rel (%p113) target = $region20
      $region19: #{tpu_custom_call.1} parent=5 // pred_region
        // Predicated region
        $region21: #{tpu_custom_call.1} parent=19 // pred_check
          %p116 = pneg %p56
        $region22: #{tpu_custom_call.1} parent=19 // pred_check_branch
          %118 = sbr.rel (%p116) target = $region24
        $region23: #{tpu_custom_call.1} parent=19 // pred_region
          %s119 = sand.u32 %s46, 1
          %s120 = scalar_lea.sflag [#allocation3], %s119
          %s121 = sand.u32 %s46, 1
          %s122 = smul.addr %s121, 32
          %s123 = scalar_lea.vmem [#allocation6], %s122
          %s125 = ssub.s32 512, 512
          %126 = vsyncadd %s120, %s125
          %s127 = smul.addr %s15, 4
          %s128 = smul.addr %s127, 128
          %s129 = scalar_lea.hbm %s1, %s128
          %s130 = sshll.u32 %s123, 4
          %s131 = int_to_ptr.vmem [resolvable:$true] %s130
          %136 = dma.hbm_to_vmem [thread:$0]  %s129, 512, %s131, %s120, 256, 256, 16
        $region24: #{tpu_custom_call.1} parent=19 // pred_fallthru
          _
      $region20: #{tpu_custom_call.1} parent=5 // pred_fallthru
        _
      %p137 = scmp.le.s32.totalorder 1, %s15
      %p138 = scmp.lt.s32.totalorder %s15, 3
      %p139 = pnand %p137, %p138
      %p140 = pneg %p139
      // Predicated region
      $region25: #{tpu_custom_call.1} parent=5 // pred_check
        _
      $region26: #{tpu_custom_call.1} parent=5 // pred_check_branch
        %142 = sbr.rel (%p139) target = $region28
      $region27: #{tpu_custom_call.1} parent=5 // pred_region
        %s143 = ssub.s32 %s15, 1
        // Predicated region
        $region29: #{tpu_custom_call.1} parent=27 // pred_check
          %p144 = pneg %p36
        $region30: #{tpu_custom_call.1} parent=27 // pred_check_branch
          %146 = sbr.rel (%p144) target = $region32
        $region31: #{tpu_custom_call.1} parent=27 // pred_region
          %147 = dma.done [#allocation5], 16
        $region32: #{tpu_custom_call.1} parent=27 // pred_fallthru
          _
        %s148 = sand.u32 %s49, 1
        %s149 = scalar_lea.sflag [#allocation3], %s148
        %s150 = sand.u32 %s49, 1
        %s151 = smul.addr %s150, 32
        %s152 = scalar_lea.vmem [#allocation6], %s151
        // Predicated region
        $region33: #{tpu_custom_call.1} parent=27 // pred_check
          %p153 = pneg %p62
        $region34: #{tpu_custom_call.1} parent=27 // pred_check_branch
          %155 = sbr.rel (%p153) target = $region36
        $region35: #{tpu_custom_call.1} parent=27 // pred_region
          %156 = dma.done %s149, 512
        $region36: #{tpu_custom_call.1} parent=27 // pred_fallthru
          _
        %157 = sfence
        %p158 = pneg %p36
        %p159 = pneg %p33
        %s160 = sand.u32 %s49, 1
        %s161 = scalar_lea.sflag [#allocation3], %s160
        %s162 = sand.u32 %s49, 1
        %s163 = smul.addr %s162, 32
        %s164 = scalar_lea.vmem [#allocation6], %s163
        %p165 = pneg %p62
        %p166 = pneg %p59
        %p167 = pneg %p88
        %p168 = pneg %p85
        %s169 = sand.u32 %s75, 1
        %s170 = scalar_lea.sflag [#allocation4], %s169
        %s171 = sand.u32 %s75, 1
        %s172 = smul.addr %s171, 32
        %s173 = scalar_lea.vmem [#allocation7], %s172
        %v174 = vld [vmem:[%s152] sm:$0xff]
        %v175 = vld [vmem:[%s152 + $0x8] sm:$0xff]
        %v176 = vld [vmem:[%s152 + $0x10] sm:$0xff]
        %v177 = vld [vmem:[%s152 + $0x18] sm:$0xff]
        %v178 = vadd.f32 %v174, %v175
        %179 = vadd.xlane.f32.xlu0 %v178
        %v180 = vpop.xlane.xlu0 %179
        %v181 = vadd.f32 %v176, %v177
        %182 = vadd.xlane.f32.xlu0 %v181
        %v183 = vpop.xlane.xlu0 %182
        %v184 = vmul.f32 %v180, 0.00390625
        %v185 = vmul.f32 %v183, 0.00390625
        %v186 = vlaneseq
        %v187 = vshrl.u32 %v186, 7
        %v188 = vadd.s32 %v187, 8
        %v189 = vlaneseq
        %v190 = vand.u32 %v189, 127
        %s191 = sld [smem:[#allocation2]]
        %v192 = vsub.s32 %v190, %v187
        %v193 = vsub.s32 %v190, %v188
        %vm194 = vcmp.eq.s32.totalorder %v192, 4294967295
        %vm195 = vcmp.eq.s32.totalorder %v193, 4294967295
        %v196 = vstv %s191
        %v197 = vsel %vm194, %v196, 0.0
        %v198 = vsel %vm195, %v196, 0.0
        %v199 = vadd.f32 %v197, 0.0
        %v200 = vadd.f32 %v198, 0.0
        %s201 = sld [smem:[#allocation2 + $0x1]]
        %vm202 = vcmp.eq.s32.totalorder %v192, 0
        %vm203 = vcmp.eq.s32.totalorder %v193, 0
        %v204 = vstv %s201
        %v205 = vsel %vm202, %v204, 0.0
        %v206 = vsel %vm203, %v204, 0.0
        %v207 = vadd.f32 %v199, %v205
        %v208 = vadd.f32 %v200, %v206
        %s209 = sld [smem:[#allocation2 + $0x2]]
        %vm210 = vcmp.eq.s32.totalorder %v192, 1
        %vm211 = vcmp.eq.s32.totalorder %v193, 1
        %v212 = vstv %s209
        %v213 = vsel %vm210, %v212, 0.0
        %v214 = vsel %vm211, %v212, 0.0
        %v215 = vadd.f32 %v207, %v213
        %v216 = vadd.f32 %v208, %v214
        %vm217 = vcmask 130048
        %v219 = vsel %vm217, %v215, 0
        %v222 = vsel %vm217, %v216, 0
        %224 = vmatprep.subr.mxu0 0.0
        %225 = vmatpush1.msra.mxu0 %v184
        %226 = vmatprep.subr.mxu0 0.0
        %227 = vmatpush1.msra.mxu0 %v185
        %228 = vmatprep.subr.mxu0 0.0
        %229 = vmatpush1.msra.mxu0 0.0
        %230 = vmatprep.subr.mxu0 0.0
        %231 = vmatpush1.msra.mxu0 0.0
        %232 = vmatprep.subr.mxu0 0.0
        %233 = vmatpush1.msra.mxu0 0.0
        %234 = vmatprep.subr.mxu0 0.0
        %235 = vmatpush1.msra.mxu0 0.0
        %236 = vmatprep.subr.mxu0 0.0
        %237 = vmatpush1.msra.mxu0 0.0
        %238 = vmatprep.subr.mxu0 0.0
        %239 = vmatpush1.msra.mxu0 0.0
        %240 = vmatprep.subr.mxu0 0.0
        %241 = vmatpush1.msra.mxu0 0.0
        %242 = vmatprep.subr.mxu0 0.0
        %243 = vmatpush1.msra.mxu0 0.0
        %244 = vmatprep.subr.mxu0 0.0
        %245 = vmatpush1.msra.mxu0 0.0
        %246 = vmatprep.subr.mxu0 0.0
        %247 = vmatpush1.msra.mxu0 0.0
        %248 = vmatprep.subr.mxu0 0.0
        %249 = vmatpush1.msra.mxu0 0.0
        %250 = vmatprep.subr.mxu0 0.0
        %251 = vmatpush1.msra.mxu0 0.0
        %252 = vmatprep.subr.mxu0 0.0
        %253 = vmatpush1.msra.mxu0 0.0
        %254 = vmatprep.subr.mxu0 0.0
        %255 = vmatpush1.msra.mxu0 0.0
        %256 = vmatprep.subr.mxu0 0.0
        %257 = vmatpush1.msra.mxu0 0.0
        %258 = vmatprep.subr.mxu0 0.0
        %259 = vmatpush1.msra.mxu0 0.0
        %260 = vmatprep.subr.mxu0 0.0
        %261 = vmatpush1.msra.mxu0 0.0
        %262 = vmatprep.subr.mxu0 0.0
        %263 = vmatpush1.msra.mxu0 0.0
        %264 = vmatprep.subr.mxu0 0.0
        %265 = vmatpush1.msra.mxu0 0.0
        %266 = vmatprep.subr.mxu0 0.0
        %267 = vmatpush1.msra.mxu0 0.0
        %268 = vmatprep.subr.mxu0 0.0
        %269 = vmatpush1.msra.mxu0 0.0
        %270 = vmatprep.subr.mxu0 0.0
        %271 = vmatpush1.msra.mxu0 0.0
        %272 = vmatprep.subr.mxu0 0.0
        %273 = vmatpush1.msra.mxu0 0.0
        %274 = vmatprep.subr.mxu0 0.0
        %275 = vmatpush1.msra.mxu0 0.0
        %276 = vmatprep.subr.mxu0 0.0
        %277 = vmatpush1.msra.mxu0 0.0
        %278 = vmatprep.subr.mxu0 0.0
        %279 = vmatpush1.msra.mxu0 0.0
        %280 = vmatprep.subr.mxu0 0.0
        %281 = vmatpush1.msra.mxu0 0.0
        %282 = vmatprep.subr.mxu0 0.0
        %283 = vmatpush1.msra.mxu0 0.0
        %284 = vmatprep.subr.mxu0 0.0
        %285 = vmatpush1.msra.mxu0 0.0
        %286 = vmatprep.subr.mxu0 0.0
        %287 = vmatpush1.msra.mxu0 0.0
        %288 = vmatprep.mubr.f32.mxu0 0.0
        %289 = vmatmul.mubr.f32.gmra.mrb[0].mxu0 %v219
        %v290 = vpop.f32.mrb[0].mxu0
        %v291 = vadd.f32 0.0, %v290
        %v292 = vpop.f32.mrb[0].mxu0
        %293 = vmatprep.mubr.f32.mxu0 0.0
        %294 = vmatmul.mubr.f32.gmra.mrb[0].mxu0 %v222
        %v295 = vpop.f32.mrb[0].mxu0
        %v296 = vadd.f32 0.0, %v295
        %v297 = vpop.f32.mrb[0].mxu0
        %298 = vdwg.mxu0
        %v299 = vsub.f32 0.0, %v291
        %v300 = vsub.f32 0.0, %v296
        %v301 = vmul.f32 %v299, 1.442695
        %v302 = vpow.pop %v301
        %v303 = vmul.f32 %v300, 1.442695
        %v304 = vpow.pop %v303
        %v305 = vadd.f32 %v302, 1.0
        %v306 = vadd.f32 %v304, 1.0
        %v307 = vrcp.pop %v305
        %v308 = vmul.f32 1.0, %v307
        %v309 = vrcp.pop %v306
        %v310 = vmul.f32 1.0, %v309
        %312 = vset.pattern.permute.xlu0 0
        %313 = vperm.xlu0 %312, %v308
        %v314 = vpop.permute.xlu0 %313
        %317 = vset.pattern.permute.xlu0 0
        %318 = vperm.xlu0 %317, %v310
        %v319 = vpop.permute.xlu0 %318
        %v321 = vmul.f32 %v174, %v314
        %v322 = vmul.f32 %v175, %v314
        %v323 = vmul.f32 %v176, %v319
        %v324 = vmul.f32 %v177, %v319
        %325 = vst [vmem:[%s173] sm:$0xff] %v321
        %326 = vst [vmem:[%s173 + $0x8] sm:$0xff] %v322
        %327 = vst [vmem:[%s173 + $0x10] sm:$0xff] %v323
        %328 = vst [vmem:[%s173 + $0x18] sm:$0xff] %v324
        %s329 = sand.u32 %s75, 1
        %s330 = scalar_lea.sflag [#allocation4], %s329
        %s331 = sand.u32 %s75, 1
        %s332 = smul.addr %s331, 32
        %s333 = scalar_lea.vmem [#allocation7], %s332
        // Predicated region
        $region37: #{tpu_custom_call.1} parent=27 // pred_check
          %p334 = pneg %p85
        $region38: #{tpu_custom_call.1} parent=27 // pred_check_branch
          %336 = sbr.rel (%p334) target = $region40
        $region39: #{tpu_custom_call.1} parent=27 // pred_region
          %s338 = ssub.s32 512, 512
          %339 = vsyncadd %s330, %s338
          %s340 = smul.addr %s20, 4
          %s341 = smul.addr %s340, 128
          %s342 = scalar_lea.hbm %s2, %s341
          %s343 = sshll.u32 %s333, 4
          %s344 = int_to_ptr.vmem [resolvable:$true] %s343
          %349 = dma.vmem_to_hbm [thread:$0]  %s344, 512, %s342, %s330, 256, 256, 16
        $region40: #{tpu_custom_call.1} parent=27 // pred_fallthru
          _
      $region28: #{tpu_custom_call.1} parent=5 // pred_fallthru
        _
      %p350 = scmp.le.s32.totalorder 2, %s15
      // Predicated region
      $region41: #{tpu_custom_call.1} parent=5 // pred_check
        %p351 = pneg %p350
      $region42: #{tpu_custom_call.1} parent=5 // pred_check_branch
        %353 = sbr.rel (%p351) target = $region44
      $region43: #{tpu_custom_call.1} parent=5 // pred_region
        %s354 = ssub.s32 %s15, 2
        // Predicated region
        $region45: #{tpu_custom_call.1} parent=43 // pred_check
          %p355 = pneg %p91
        $region46: #{tpu_custom_call.1} parent=43 // pred_check_branch
          %357 = sbr.rel (%p355) target = $region48
        $region47: #{tpu_custom_call.1} parent=43 // pred_region
          %s358 = sand.u32 %s76, 1
          %s359 = scalar_lea.sflag [#allocation4], %s358
          %s360 = sand.u32 %s76, 1
          %s361 = smul.addr %s360, 32
          %s362 = scalar_lea.vmem [#allocation7], %s361
          %363 = dma.done %s359, 512
        $region48: #{tpu_custom_call.1} parent=43 // pred_fallthru
          _
      $region44: #{tpu_custom_call.1} parent=5 // pred_fallthru
        _
    $region6: #{tpu_custom_call.1} parent=1 // loop_footer
      %s19 = sadd.s32 1, %s15
    $region7: #{tpu_custom_call.1} parent=1 // loop_footer_branch
      %14 = sbr.rel target = $region3
    $region8: #{tpu_custom_call.1} parent=1 // loop_exit
      _
    %364 = vsyncpa [#allocation3], 1
    %s365 = scalar_lea.sflag [#allocation3], 1
    %366 = vsyncpa %s365, 1
    %367 = vsyncpa [#allocation4], 1
    %s368 = scalar_lea.sflag [#allocation4], 1
    %369 = vsyncpa %s368, 1
    %370 = vsyncpa [#allocation5], 1
    %s371 = scalar_lea.sflag [#allocation5], 1
    %372 = vsyncpa %s371, 1

</llo_original>
